<compile_context>
chip_gen: v6e
topology: v6e:2x2x1
jax: 0.10.0
libtpu: 0.0.40
codegen_flags: <defaults>
</compile_context>

<pallas_src>
import jax
import jax.numpy as jnp
from jax import lax
from jax.experimental import pallas as pl
from jax.experimental.pallas import tpu as pltpu

EMB_DIM = 32        # cfg.emb_dim
N_REAL_E = 24       # len(e_dict)
ANON_E = 8          # cfg.anon_e
N_ENTITY = N_REAL_E + ANON_E
NPAD = 128          # target-entity axis padded to a full vreg lane width


# ---------------------------------------------------------------- glue (host)
def get_rights(right):
    ridges = []
    axiom_parts = right.split(' ')
    counter = 0
    for i, part in enumerate(axiom_parts):
        counter += part.count('(')
        counter -= part.count(')')
        if counter == 0:
            ridges.append(i)
    if len(ridges) == 1:
        return [right]
    elif len(ridges) > 1:
        rights = []
        for i in range(len(ridges)):
            if i == 0:
                rights.append(' '.join(axiom_parts[:ridges[0] + 1]))
            else:
                rights.append(' '.join(axiom_parts[ridges[i - 1] + 1:ridges[i] + 1]))
        return rights
    else:
        raise ValueError


# ---------------------------------------------------------------- fused kernel
def _build_axiom_kernel(plan, n_c_leaves, n_entity, n_rows, emb_dim):
    """Return a Pallas kernel that evaluates the whole axiom DAG in VMEM.

    Concept fuzzy sets are lane-dense (1, NPAD) rows (target entity j on lanes).
    Relation fuzzy sets are (NROWS, NPAD) tiles (source entity i on sublanes,
    target entity j on lanes), with NROWS = n_entity rounded up to 8.
    Operands:
      e_lane_ref : (D, NPAD)  e^T, entity on lanes, zero padded beyond n_entity
      tbl_ref    : (L, D)     rows = [w_left, w_right, bias, c_leaves..., r_leaves..., pad]
    """
    D = emb_dim
    NROWS = n_rows

    def kernel(e_lane_ref, tbl_ref, o_ref):
        e_lane = e_lane_ref[...]                 # (D, NPAD)
        tbl = tbl_ref[...]                       # (L, D)

        wl_row = tbl[0:1, :]                     # (1, D)  fc_0 weight, first half
        wr_row = tbl[1:2, :]                     # (1, D)  fc_0 weight, second half
        bias = tbl[2:3, 0:1]                     # (1, 1)

        # Identity masks used for cheap layout conversions (row<->column) —
        # multiply + reduce only, no explicit transposes.
        eye_d = (lax.broadcasted_iota(jnp.int32, (D, D), 0) ==
                 lax.broadcasted_iota(jnp.int32, (D, D), 1)).astype(jnp.float32)
        eye_n = (lax.broadcasted_iota(jnp.int32, (NROWS, NPAD), 0) ==
                 lax.broadcasted_iota(jnp.int32, (NROWS, NPAD), 1)).astype(jnp.float32)

        def row_to_col(row, eye_f):              # (1, W) -> (H, 1)
            return jnp.sum(row * eye_f, axis=1, keepdims=True)

        def col_to_row(col, eye_f):              # (H, 1) -> (1, W), zero beyond H
            return jnp.sum(col * eye_f, axis=0, keepdims=True)

        # Hoisted once-per-forward projections: VPU multiply + reductions only
        # (no MXU — K=32, N=1 contractions).
        wl_col = row_to_col(wl_row, eye_d)                               # (D, 1)
        wr_col = row_to_col(wr_row, eye_d)                               # (D, 1)
        e_wr_row = jnp.sum(e_lane * wr_col, axis=0, keepdims=True)       # (1, NPAD)
        e_wl_row = jnp.sum(e_lane * wl_col, axis=0, keepdims=True)       # (1, NPAD)
        e_wl_col = row_to_col(e_wl_row, eye_n)                           # (NROWS, 1)

        # Hoisted per-leaf projections: row 3+k -> c-leaf k, row 3+nc+k -> r-leaf k.
        tbl_wl_col = jnp.sum(tbl * wl_row, axis=1, keepdims=True)        # (L, 1)

        # (1, NPAD) lane-validity mask over padded target entities j.
        lane_valid = lax.broadcasted_iota(jnp.int32, (1, NPAD), 1) < n_entity

        def sigmoid(x):                           # single-EUP tanh form
            return 0.5 * jnp.tanh(0.5 * x) + 0.5

        # Trace-time memoization: repeated roles / concepts / subtrees are
        # evaluated exactly once inside the kernel.
        c_cache, r_cache, node_cache = {}, {}, {}

        def concept_fs(k):
            if k not in c_cache:
                c_wl = tbl_wl_col[3 + k:4 + k, 0:1]                      # (1, 1)
                c_cache[k] = sigmoid(e_wr_row + c_wl + bias)             # (1, NPAD)
            return c_cache[k]

        def relation_fs(k):
            if k not in r_cache:
                r_wl = tbl_wl_col[3 + n_c_leaves + k:
                                  4 + n_c_leaves + k, 0:1]               # (1, 1)
                # r_fs[i, j] = sigmoid((e_i + r)·w_l + e_j·w_r + b): outer broadcast add.
                r_cache[k] = sigmoid(e_wl_col + r_wl + e_wr_row + bias)  # (NROWS, NPAD)
            return r_cache[k]

        def ev(node):
            if node in node_cache:
                return node_cache[node]
            op = node[0]
            if op == 'C':
                out = concept_fs(node[1])
            elif op == 'NOTHING':
                out = jnp.zeros((1, NPAD), jnp.float32)
            elif op == 'AND':                     # product t-norm
                out = ev(node[1]) * ev(node[2])
            elif op == 'OR':                      # product t-conorm
                x, y = ev(node[1]), ev(node[2])
                out = x + y - x * y
            elif op == 'NOT':
                out = 1.0 - ev(node[1])
            elif op == 'EXIST':
                r = relation_fs(node[1])
                c = jnp.where(lane_valid, ev(node[2]), 0.0)              # 0 on padded lanes
                val = r * c                                              # (NROWS, NPAD)
                col = jnp.max(val, axis=1, keepdims=True)                # (NROWS, 1)
                out = col_to_row(col, eye_n)                             # (1, NPAD)
            elif op == 'FORALL':                  # residuum 'notCorD' (product)
                r = relation_fs(node[1])
                c = jnp.where(lane_valid, ev(node[2]), 1.0)              # 1 on padded lanes
                nr = 1.0 - r
                val = nr + c - nr * c                                    # (NROWS, NPAD)
                col = jnp.min(val, axis=1, keepdims=True)                # (NROWS, 1)
                out = col_to_row(col, eye_n)                             # (1, NPAD)
            else:
                raise ValueError(op)
            node_cache[node] = out
            return out

        o_ref[...] = ev(plan)

    return kernel


# ---------------------------------------------------------------- parameters
def _xavier_uniform(key, shape):
    fan_out, fan_in = shape[0], shape[1]
    bound = (6.0 / (fan_in + fan_out)) ** 0.5
    return jax.random.uniform(key, shape, jnp.float32, -bound, bound)


class FalconPallas:
    """JAX/Pallas port of FALCON.forward (cfg.t_norm='product', residuum='notCorD')."""

    def __init__(self, c_dict, e_dict, r_dict, emb_dim, anon_e, key,
                 use_pallas=True):
        self.c_dict = c_dict
        self.e_dict = e_dict
        self.r_dict = r_dict
        self.anon_e = anon_e
        self.emb_dim = emb_dim
        self.n_entity = len(e_dict) + anon_e
        self.use_pallas = use_pallas

        k = jax.random.split(key, 5)
        self.c_embedding = _xavier_uniform(k[0], (len(c_dict), emb_dim))
        self.r_embedding = _xavier_uniform(k[1], (len(r_dict), emb_dim))
        self.e_embedding = _xavier_uniform(k[2], (len(e_dict), emb_dim))
        fc_w = _xavier_uniform(k[3], (1, 2 * emb_dim))    # torch Linear(2D, 1).weight
        # fc_0 on concat([left, right]) splits into two half-weights.
        self.w_left_row = fc_w[:, :emb_dim]                   # (1, D)  applies to c / (e+r)
        self.w_right_row = fc_w[:, emb_dim:]                  # (1, D)  applies to target e
        b_bound = 1.0 / (2 * emb_dim) ** 0.5
        self.fc_b = jax.random.uniform(k[4], (1, 1), jnp.float32, -b_bound, b_bound)
        self.nothing = jnp.zeros((self.n_entity,), jnp.float32)

        self._axiom_cache = {}    # axiom string -> jitted fused forward

    # ------------------------------------------------------------ axiom -> plan
    def _build_plan(self, axiom, c_ids, r_ids):
        if axiom[0] == '<' or axiom == 'owl:Thing':
            cid = self.c_dict[axiom]
            if cid not in c_ids:
                c_ids.append(cid)
            return ('C', c_ids.index(cid))
        elif axiom == 'owl:Nothing':
            return ('NOTHING',)
        elif axiom[:21] == 'ObjectIntersectionOf(':
            axiom_parts = axiom.split(' ')
            counter = 0
            ridge = 0
            for i, part in enumerate(axiom_parts):
                counter += part.count('(')
                counter -= part.count(')')
                if counter == 1:
                    ridge = i
                    break
            left = ' '.join(axiom_parts[:ridge + 1])[21:]
            right = ' '.join(axiom_parts[ridge + 1:])[:-1]
            rights = get_rights(right)
            node = ('AND', self._build_plan(left, c_ids, r_ids),
                    self._build_plan(rights[0], c_ids, r_ids))
            for rid in range(1, len(rights)):
                node = ('AND', node, self._build_plan(rights[rid], c_ids, r_ids))
            return node
        elif axiom[:14] == 'ObjectUnionOf(':
            axiom_parts = axiom.split(' ')
            counter = 0
            ridge = 0
            for i, part in enumerate(axiom_parts):
                counter += part.count('(')
                counter -= part.count(')')
                if counter == 1:
                    ridge = i
                    break
            left = ' '.join(axiom_parts[:ridge + 1])[14:]
            right = ' '.join(axiom_parts[ridge + 1:])[:-1]
            rights = get_rights(right)
            node = ('OR', self._build_plan(left, c_ids, r_ids),
                    self._build_plan(rights[0], c_ids, r_ids))
            for rid in range(1, len(rights)):
                node = ('OR', node, self._build_plan(rights[rid], c_ids, r_ids))
            return node
        elif axiom[:22] == 'ObjectSomeValuesFrom(<':
            axiom_parts = axiom.split(' ')
            rel = self.r_dict[axiom_parts[0][21:]]
            if rel not in r_ids:
                r_ids.append(rel)
            right = ' '.join(axiom_parts[1:])[:-1]
            return ('EXIST', r_ids.index(rel),
                    self._build_plan(right, c_ids, r_ids))
        elif axiom[:21] == 'ObjectAllValuesFrom(<':
            axiom_parts = axiom.split(' ')
            rel = self.r_dict[axiom_parts[0][20:]]
            if rel not in r_ids:
                r_ids.append(rel)
            right = ' '.join(axiom_parts[1:])[:-1]
            return ('FORALL', r_ids.index(rel),
                    self._build_plan(right, c_ids, r_ids))
        elif axiom[:19] == 'ObjectComplementOf(':
            return ('NOT', self._build_plan(axiom[19:-1], c_ids, r_ids))
        else:
            raise ValueError(axiom)

    # ------------------------------------------------------------ fused forward
    def _make_axiom_fn(self, axiom):
        c_ids, r_ids = [], []
        plan = self._build_plan(axiom, c_ids, r_ids)
        n_ent = self.n_entity
        n_rows = -(-n_ent // 8) * 8                  # source-entity rows, mult of 8
        D = self.emb_dim
        c_idx = tuple(c_ids) if c_ids else (0,)
        r_idx = tuple(r_ids) if r_ids else (0,)
        nc, nr = len(c_idx), len(r_idx)
        n_tbl = 3 + nc + nr
        tbl_rows = -(-n_tbl // 8) * 8                # table rows padded to 8 sublanes

        kernel = _build_axiom_kernel(plan, nc, n_ent, n_rows, D)
        vmem = pl.BlockSpec(memory_space=pltpu.MemorySpace.VMEM)
        call = pl.pallas_call(
            kernel,
            out_shape=jax.ShapeDtypeStruct((1, NPAD), jnp.float32),
            in_specs=[vmem, vmem],
            out_specs=vmem,
        )

        def fwd(c_embedding, r_embedding, e_embedding, anon_e_emb,
                w_left_row, w_right_row, fc_b):
            # Operand 1: lane-dense entity slab (D, NPAD), entity on lanes.
            e_full = jnp.concatenate([e_embedding, anon_e_emb], axis=0)      # (N, D)
            e_lane = jnp.pad(jnp.transpose(e_full),
                             ((0, 0), (0, NPAD - n_ent)))                    # (D, NPAD)
            # Operand 2: packed parameter/leaf table (tbl_rows, D).
            c_leaves = c_embedding[jnp.array(c_idx, jnp.int32), :]           # (nc, D)
            r_leaves = r_embedding[jnp.array(r_idx, jnp.int32), :]           # (nr, D)
            bias_row = jnp.zeros((1, D), jnp.float32).at[0, 0].set(fc_b[0, 0])
            tbl = jnp.concatenate(
                [w_left_row, w_right_row, bias_row, c_leaves, r_leaves], axis=0)
            tbl = jnp.pad(tbl, ((0, tbl_rows - n_tbl), (0, 0)))              # (tbl_rows, D)
            out = call(e_lane, tbl)
            return out[0, :n_ent]

        return jax.jit(fwd)

    def _get_axiom_fn(self, axiom):
        fn = self._axiom_cache.get(axiom)
        if fn is None:
            fn = self._make_axiom_fn(axiom)
            self._axiom_cache[axiom] = fn
        return fn

    def forward(self, axiom, anon_e_emb):
        if self.use_pallas:
            fn = self._get_axiom_fn(axiom)
            return fn(self.c_embedding, self.r_embedding, self.e_embedding,
                      anon_e_emb, self.w_left_row, self.w_right_row, self.fc_b)
        return self._forward_ref(axiom, anon_e_emb)

    # ------------------------------------------------------------ pure-JAX reference
    def _e_full(self, anon_e_emb):
        return jnp.concatenate([self.e_embedding, anon_e_emb], axis=0)

    def _get_c_fs_ref(self, c_emb, anon_e_emb):
        e_emb = self._e_full(anon_e_emb)
        c2 = c_emb.reshape(1, -1)
        logits = (e_emb @ jnp.transpose(self.w_right_row)
                  + c2 @ jnp.transpose(self.w_left_row) + self.fc_b)
        return jax.nn.sigmoid(logits).reshape(-1)

    def _get_r_fs_ref(self, r_emb, anon_e_emb):
        e_emb = self._e_full(anon_e_emb)
        r2 = r_emb.reshape(1, -1)
        a = (e_emb + r2) @ jnp.transpose(self.w_left_row)
        b = jnp.transpose(e_emb @ jnp.transpose(self.w_right_row))
        return jax.nn.sigmoid(a + b + self.fc_b)

    def _forward_ref(self, axiom, anon_e_emb):
        if axiom[0] == '<' or axiom == 'owl:Thing':
            c_emb = self.c_embedding[self.c_dict[axiom]]
            return self._get_c_fs_ref(c_emb, anon_e_emb)
        elif axiom == 'owl:Nothing':
            return self.nothing
        elif axiom[:21] == 'ObjectIntersectionOf(':
            axiom_parts = axiom.split(' ')
            counter = 0
            ridge = 0
            for i, part in enumerate(axiom_parts):
                counter += part.count('(')
                counter -= part.count(')')
                if counter == 1:
                    ridge = i
                    break
            left = ' '.join(axiom_parts[:ridge + 1])[21:]
            right = ' '.join(axiom_parts[ridge + 1:])[:-1]
            rights = get_rights(right)
            ret = self._forward_ref(left, anon_e_emb) * \
                self._forward_ref(rights[0], anon_e_emb)
            for rid in range(1, len(rights)):
                ret = ret * self._forward_ref(rights[rid], anon_e_emb)
            return ret
        elif axiom[:14] == 'ObjectUnionOf(':
            axiom_parts = axiom.split(' ')
            counter = 0
            ridge = 0
            for i, part in enumerate(axiom_parts):
                counter += part.count('(')
                counter -= part.count(')')
                if counter == 1:
                    ridge = i
                    break
            left = ' '.join(axiom_parts[:ridge + 1])[14:]
            right = ' '.join(axiom_parts[ridge + 1:])[:-1]
            rights = get_rights(right)
            x = self._forward_ref(left, anon_e_emb)
            y = self._forward_ref(rights[0], anon_e_emb)
            ret = x + y - x * y
            for rid in range(1, len(rights)):
                y = self._forward_ref(rights[rid], anon_e_emb)
                ret = ret + y - ret * y
            return ret
        elif axiom[:22] == 'ObjectSomeValuesFrom(<':
            axiom_parts = axiom.split(' ')
            r_emb = self.r_embedding[self.r_dict[axiom_parts[0][21:]]]
            r_fs = self._get_r_fs_ref(r_emb, anon_e_emb)
            right = ' '.join(axiom_parts[1:])[:-1]
            c = self._forward_ref(right, anon_e_emb).reshape(1, -1)
            return jnp.max(r_fs * c, axis=-1)
        elif axiom[:21] == 'ObjectAllValuesFrom(<':
            axiom_parts = axiom.split(' ')
            r_emb = self.r_embedding[self.r_dict[axiom_parts[0][20:]]]
            r_fs = self._get_r_fs_ref(r_emb, anon_e_emb)
            right = ' '.join(axiom_parts[1:])[:-1]
            c = self._forward_ref(right, anon_e_emb).reshape(1, -1)
            nr = 1.0 - r_fs
            return jnp.min(nr + c - nr * c, axis=-1)
        elif axiom[:19] == 'ObjectComplementOf(':
            return 1.0 - self._forward_ref(axiom[19:-1], anon_e_emb)
        else:
            raise ValueError(axiom)


# ---------------------------------------------------------------- main
if __name__ == "__main__":
    c_dict = {'<c0>': 0, '<c1>': 1, '<c2>': 2, 'owl:Thing': 3}
    e_dict = {'<e%d>' % i: i for i in range(N_REAL_E)}
    r_dict = {'<r0>': 0, '<http://mowl.borg/associated_with>': 1}

    key = jax.random.PRNGKey(0)
    k_model, k_anon = jax.random.split(key)
    model = FalconPallas(c_dict, e_dict, r_dict, EMB_DIM, ANON_E, k_model)
    anon_e_emb = 0.1 * jax.random.normal(k_anon, (ANON_E, EMB_DIM), jnp.float32)

    # Axiom re-uses role <r0> (EXIST and FORALL) and concept <c1> twice:
    # exercises the trace-time memoization path.
    axiom = ('ObjectIntersectionOf(<c0> '
             'ObjectSomeValuesFrom(<r0> ObjectComplementOf(<c1>)) '
             'ObjectAllValuesFrom(<r0> ObjectUnionOf(<c1> <c2>)))')
    axiom2 = 'ObjectUnionOf(owl:Thing owl:Nothing)'

    out = jax.block_until_ready(model.forward(axiom, anon_e_emb))
    out2 = jax.block_until_ready(model.forward(axiom2, anon_e_emb))
    # second call hits the cached jitted/fused kernel (no re-trace)
    out_again = jax.block_until_ready(model.forward(axiom, anon_e_emb))

    # Cross-check the fused Pallas path against a pure-JAX reference.
    ref = jax.block_until_ready(model._forward_ref(axiom, anon_e_emb))
    ref2 = jax.block_until_ready(model._forward_ref(axiom2, anon_e_emb))

    assert out.shape == (N_ENTITY,) and out2.shape == (N_ENTITY,)
    assert bool(jnp.all(jnp.isfinite(out))) and bool(jnp.all(jnp.isfinite(out2)))
    assert jnp.allclose(out, ref, atol=1e-5), (out, ref)
    assert jnp.allclose(out2, ref2, atol=1e-5), (out2, ref2)
    assert jnp.allclose(out, out_again, atol=0.0)
    print("KERNEL_OK")
</pallas_src>

<mosaic_0001>
module attributes {stable_mosaic.version = 11 : i64} {
  func.func @kernel(%arg0: memref<32x128xf32, #tpu.memory_space<vmem>>, %arg1: memref<8x32xf32, #tpu.memory_space<vmem>>, %arg2: memref<1x128xf32, #tpu.memory_space<vmem>>) attributes {dimension_semantics = [], scalar_prefetch = 0 : i64, scratch_operands = 0 : i64, tpu.core_type = #tpu.core_type<tc>} {
    %c0 = arith.constant 0 : index
    %c0_0 = arith.constant 0 : index
    %0 = vector.load %arg0[%c0, %c0_0] : memref<32x128xf32, #tpu.memory_space<vmem>>, vector<32x128xf32>
    %c0_1 = arith.constant 0 : index
    %c0_2 = arith.constant 0 : index
    %1 = vector.load %arg1[%c0_1, %c0_2] : memref<8x32xf32, #tpu.memory_space<vmem>>, vector<8x32xf32>
    %2 = vector.extract_strided_slice %1 {offsets = [0, 0], sizes = [1, 32], strides = [1, 1]} : vector<8x32xf32> to vector<1x32xf32>
    %3 = vector.extract_strided_slice %1 {offsets = [1, 0], sizes = [1, 32], strides = [1, 1]} : vector<8x32xf32> to vector<1x32xf32>
    %4 = vector.extract_strided_slice %1 {offsets = [2, 0], sizes = [1, 1], strides = [1, 1]} : vector<8x32xf32> to vector<1x1xf32>
    %5 = tpu.iota {dimensions = array<i32: 0>} : vector<32x32xi32>
    %6 = tpu.iota {dimensions = array<i32: 1>} : vector<32x32xi32>
    %7 = arith.cmpi eq, %5, %6 : vector<32x32xi32>
    %8 = arith.extui %7 : vector<32x32xi1> to vector<32x32xi32>
    %9 = arith.sitofp %8 : vector<32x32xi32> to vector<32x32xf32>
    %10 = tpu.iota {dimensions = array<i32: 0>} : vector<32x128xi32>
    %11 = tpu.iota {dimensions = array<i32: 1>} : vector<32x128xi32>
    %12 = arith.cmpi eq, %10, %11 : vector<32x128xi32>
    %13 = arith.extui %12 : vector<32x128xi1> to vector<32x128xi32>
    %14 = arith.sitofp %13 : vector<32x128xi32> to vector<32x128xf32>
    %15 = vector.broadcast %2 : vector<1x32xf32> to vector<32x32xf32>
    %16 = arith.mulf %15, %9 : vector<32x32xf32>
    %cst = arith.constant dense<0.000000e+00> : vector<32xf32>
    %17 = vector.multi_reduction <add>, %16, %cst [1] : vector<32x32xf32> to vector<32xf32>
    %18 = vector.shape_cast %17 : vector<32xf32> to vector<32x1xf32>
    %19 = vector.broadcast %3 : vector<1x32xf32> to vector<32x32xf32>
    %20 = arith.mulf %19, %9 : vector<32x32xf32>
    %cst_3 = arith.constant dense<0.000000e+00> : vector<32xf32>
    %21 = vector.multi_reduction <add>, %20, %cst_3 [1] : vector<32x32xf32> to vector<32xf32>
    %22 = vector.shape_cast %21 : vector<32xf32> to vector<32x1xf32>
    %23 = vector.broadcast %22 : vector<32x1xf32> to vector<32x128xf32>
    %24 = arith.mulf %0, %23 : vector<32x128xf32>
    %cst_4 = arith.constant dense<0.000000e+00> : vector<128xf32>
    %25 = vector.multi_reduction <add>, %24, %cst_4 [0] : vector<32x128xf32> to vector<128xf32>
    %26 = vector.shape_cast %25 : vector<128xf32> to vector<1x128xf32>
    %27 = vector.broadcast %18 : vector<32x1xf32> to vector<32x128xf32>
    %28 = arith.mulf %0, %27 : vector<32x128xf32>
    %cst_5 = arith.constant dense<0.000000e+00> : vector<128xf32>
    %29 = vector.multi_reduction <add>, %28, %cst_5 [0] : vector<32x128xf32> to vector<128xf32>
    %30 = vector.shape_cast %29 : vector<128xf32> to vector<1x128xf32>
    %31 = vector.broadcast %30 : vector<1x128xf32> to vector<32x128xf32>
    %32 = arith.mulf %31, %14 : vector<32x128xf32>
    %cst_6 = arith.constant dense<0.000000e+00> : vector<32xf32>
    %33 = vector.multi_reduction <add>, %32, %cst_6 [1] : vector<32x128xf32> to vector<32xf32>
    %34 = vector.shape_cast %33 : vector<32xf32> to vector<32x1xf32>
    %35 = vector.broadcast %2 : vector<1x32xf32> to vector<8x32xf32>
    %36 = arith.mulf %1, %35 : vector<8x32xf32>
    %cst_7 = arith.constant dense<0.000000e+00> : vector<8xf32>
    %37 = vector.multi_reduction <add>, %36, %cst_7 [1] : vector<8x32xf32> to vector<8xf32>
    %38 = vector.shape_cast %37 : vector<8xf32> to vector<8x1xf32>
    %39 = tpu.iota {dimensions = array<i32: 1>} : vector<1x128xi32>
    %c32_i32 = arith.constant 32 : i32
    %40 = vector.broadcast %c32_i32 : i32 to vector<1x128xi32>
    %41 = arith.cmpi slt, %39, %40 : vector<1x128xi32>
    %42 = vector.extract_strided_slice %38 {offsets = [3, 0], sizes = [1, 1], strides = [1, 1]} : vector<8x1xf32> to vector<1x1xf32>
    %43 = vector.broadcast %42 : vector<1x1xf32> to vector<1x128xf32>
    %44 = arith.addf %26, %43 : vector<1x128xf32>
    %45 = vector.broadcast %4 : vector<1x1xf32> to vector<1x128xf32>
    %46 = arith.addf %44, %45 : vector<1x128xf32>
    %cst_8 = arith.constant 5.000000e-01 : f32
    %47 = vector.broadcast %cst_8 : f32 to vector<1x128xf32>
    %48 = arith.mulf %47, %46 : vector<1x128xf32>
    %49 = math.tanh %48 : vector<1x128xf32>
    %cst_9 = arith.constant 5.000000e-01 : f32
    %50 = vector.broadcast %cst_9 : f32 to vector<1x128xf32>
    %51 = arith.mulf %50, %49 : vector<1x128xf32>
    %cst_10 = arith.constant 5.000000e-01 : f32
    %52 = vector.broadcast %cst_10 : f32 to vector<1x128xf32>
    %53 = arith.addf %51, %52 : vector<1x128xf32>
    %54 = vector.extract_strided_slice %38 {offsets = [6, 0], sizes = [1, 1], strides = [1, 1]} : vector<8x1xf32> to vector<1x1xf32>
    %55 = vector.broadcast %54 : vector<1x1xf32> to vector<32x1xf32>
    %56 = arith.addf %34, %55 : vector<32x1xf32>
    %57 = vector.broadcast %56 : vector<32x1xf32> to vector<32x128xf32>
    %58 = vector.broadcast %26 : vector<1x128xf32> to vector<32x128xf32>
    %59 = arith.addf %57, %58 : vector<32x128xf32>
    %60 = vector.broadcast %4 : vector<1x1xf32> to vector<32x128xf32>
    %61 = arith.addf %59, %60 : vector<32x128xf32>
    %cst_11 = arith.constant 5.000000e-01 : f32
    %62 = vector.broadcast %cst_11 : f32 to vector<32x128xf32>
    %63 = arith.mulf %62, %61 : vector<32x128xf32>
    %64 = math.tanh %63 : vector<32x128xf32>
    %cst_12 = arith.constant 5.000000e-01 : f32
    %65 = vector.broadcast %cst_12 : f32 to vector<32x128xf32>
    %66 = arith.mulf %65, %64 : vector<32x128xf32>
    %cst_13 = arith.constant 5.000000e-01 : f32
    %67 = vector.broadcast %cst_13 : f32 to vector<32x128xf32>
    %68 = arith.addf %66, %67 : vector<32x128xf32>
    %69 = vector.extract_strided_slice %38 {offsets = [4, 0], sizes = [1, 1], strides = [1, 1]} : vector<8x1xf32> to vector<1x1xf32>
    %70 = vector.broadcast %69 : vector<1x1xf32> to vector<1x128xf32>
    %71 = arith.addf %26, %70 : vector<1x128xf32>
    %72 = vector.broadcast %4 : vector<1x1xf32> to vector<1x128xf32>
    %73 = arith.addf %71, %72 : vector<1x128xf32>
    %cst_14 = arith.constant 5.000000e-01 : f32
    %74 = vector.broadcast %cst_14 : f32 to vector<1x128xf32>
    %75 = arith.mulf %74, %73 : vector<1x128xf32>
    %76 = math.tanh %75 : vector<1x128xf32>
    %cst_15 = arith.constant 5.000000e-01 : f32
    %77 = vector.broadcast %cst_15 : f32 to vector<1x128xf32>
    %78 = arith.mulf %77, %76 : vector<1x128xf32>
    %cst_16 = arith.constant 5.000000e-01 : f32
    %79 = vector.broadcast %cst_16 : f32 to vector<1x128xf32>
    %80 = arith.addf %78, %79 : vector<1x128xf32>
    %cst_17 = arith.constant 1.000000e+00 : f32
    %81 = vector.broadcast %cst_17 : f32 to vector<1x128xf32>
    %82 = arith.subf %81, %80 : vector<1x128xf32>
    %cst_18 = arith.constant 0.000000e+00 : f32
    %83 = vector.broadcast %cst_18 : f32 to vector<1x128xf32>
    %84 = arith.select %41, %82, %83 : vector<1x128xi1>, vector<1x128xf32>
    %85 = vector.broadcast %84 : vector<1x128xf32> to vector<32x128xf32>
    %86 = arith.mulf %68, %85 : vector<32x128xf32>
    %cst_19 = arith.constant dense<0xFF800000> : vector<32xf32>
    %87 = vector.multi_reduction <maximumf>, %86, %cst_19 [1] : vector<32x128xf32> to vector<32xf32>
    %88 = vector.shape_cast %87 : vector<32xf32> to vector<32x1xf32>
    %89 = vector.broadcast %88 : vector<32x1xf32> to vector<32x128xf32>
    %90 = arith.mulf %89, %14 : vector<32x128xf32>
    %cst_20 = arith.constant dense<0.000000e+00> : vector<128xf32>
    %91 = vector.multi_reduction <add>, %90, %cst_20 [0] : vector<32x128xf32> to vector<128xf32>
    %92 = vector.shape_cast %91 : vector<128xf32> to vector<1x128xf32>
    %93 = arith.mulf %53, %92 : vector<1x128xf32>
    %94 = vector.extract_strided_slice %38 {offsets = [5, 0], sizes = [1, 1], strides = [1, 1]} : vector<8x1xf32> to vector<1x1xf32>
    %95 = vector.broadcast %94 : vector<1x1xf32> to vector<1x128xf32>
    %96 = arith.addf %26, %95 : vector<1x128xf32>
    %97 = vector.broadcast %4 : vector<1x1xf32> to vector<1x128xf32>
    %98 = arith.addf %96, %97 : vector<1x128xf32>
    %cst_21 = arith.constant 5.000000e-01 : f32
    %99 = vector.broadcast %cst_21 : f32 to vector<1x128xf32>
    %100 = arith.mulf %99, %98 : vector<1x128xf32>
    %101 = math.tanh %100 : vector<1x128xf32>
    %cst_22 = arith.constant 5.000000e-01 : f32
    %102 = vector.broadcast %cst_22 : f32 to vector<1x128xf32>
    %103 = arith.mulf %102, %101 : vector<1x128xf32>
    %cst_23 = arith.constant 5.000000e-01 : f32
    %104 = vector.broadcast %cst_23 : f32 to vector<1x128xf32>
    %105 = arith.addf %103, %104 : vector<1x128xf32>
    %106 = arith.addf %80, %105 : vector<1x128xf32>
    %107 = arith.mulf %80, %105 : vector<1x128xf32>
    %108 = arith.subf %106, %107 : vector<1x128xf32>
    %cst_24 = arith.constant 1.000000e+00 : f32
    %109 = vector.broadcast %cst_24 : f32 to vector<1x128xf32>
    %110 = arith.select %41, %108, %109 : vector<1x128xi1>, vector<1x128xf32>
    %cst_25 = arith.constant 1.000000e+00 : f32
    %111 = vector.broadcast %cst_25 : f32 to vector<32x128xf32>
    %112 = arith.subf %111, %68 : vector<32x128xf32>
    %113 = vector.broadcast %110 : vector<1x128xf32> to vector<32x128xf32>
    %114 = arith.addf %112, %113 : vector<32x128xf32>
    %115 = vector.broadcast %110 : vector<1x128xf32> to vector<32x128xf32>
    %116 = arith.mulf %112, %115 : vector<32x128xf32>
    %117 = arith.subf %114, %116 : vector<32x128xf32>
    %cst_26 = arith.constant dense<0x7F800000> : vector<32xf32>
    %118 = vector.multi_reduction <minimumf>, %117, %cst_26 [1] : vector<32x128xf32> to vector<32xf32>
    %119 = vector.shape_cast %118 : vector<32xf32> to vector<32x1xf32>
    %120 = vector.broadcast %119 : vector<32x1xf32> to vector<32x128xf32>
    %121 = arith.mulf %120, %14 : vector<32x128xf32>
    %cst_27 = arith.constant dense<0.000000e+00> : vector<128xf32>
    %122 = vector.multi_reduction <add>, %121, %cst_27 [0] : vector<32x128xf32> to vector<128xf32>
    %123 = vector.shape_cast %122 : vector<128xf32> to vector<1x128xf32>
    %124 = arith.mulf %93, %123 : vector<1x128xf32>
    %c0_28 = arith.constant 0 : index
    %c0_29 = arith.constant 0 : index
    %125 = vector.load %arg2[%c0_28, %c0_29] : memref<1x128xf32, #tpu.memory_space<vmem>>, vector<1x128xf32>
    tpu.vector_store %arg2[%c0_28, %c0_29], %124 {strides = array<i32>} : memref<1x128xf32, #tpu.memory_space<vmem>>, vector<1x128xf32>,
    return
  }
}

</mosaic_0001>

<llo_original>
// kernel: fwd.1
$region0: #{fwd.1}
  #allocation0 [shape = 'u32[]', space=smem, size = 0x4, offset = 0x4, fixed_abs, tag = 'smem constant byte address 0x4 - core index']
  #allocation1 [shape = 'u32[144,128]{1,0:T(1,128)}', space=vmem, size = 0x12000, scoped, tag = 'internal scratch']
  %s0 = inlined_call_operand.vmem [shape: f32[32,128], index: 0, kind: input, shape index: {}]
  %s1 = inlined_call_operand.vmem [shape: f32[8,32], index: 1, kind: input, shape index: {}]
  %s2 = inlined_call_operand.vmem [shape: f32[1,128], index: 2, kind: output, shape index: {}]
  %s3 = sld [smem:[#allocation0]]
  $region18: #{fwd.1} parent=0
    _
  %s5 = ssub.s32 1, %s3
  %s6 = scalar_select 0, %s5, %s3
  // Predicated region
  $region2: #{fwd.1} parent=0 // pred_check
    _
  $region3: #{fwd.1} parent=0 // pred_check_branch
    %8 = sbr.rel (0) target = $region5
  $region4: #{fwd.1} parent=0 // pred_region
    _
  $region5: #{fwd.1} parent=0 // pred_fallthru
    _
  // Predicated region
  $region6: #{fwd.1} parent=0 // pred_check
    _
  $region7: #{fwd.1} parent=0 // pred_check_branch
    %10 = sbr.rel (0) target = $region9
  $region8: #{fwd.1} parent=0 // pred_region
    _
  $region9: #{fwd.1} parent=0 // pred_fallthru
    _
  %v11 = vld [vmem:[%s0] sm:$0xff]
  %v12 = vld [vmem:[%s0 + $0x8] sm:$0xff]
  %v13 = vld [vmem:[%s0 + $0x10] sm:$0xff]
  %v14 = vld [vmem:[%s0 + $0x18] sm:$0xff]
  %v15 = vld [vmem:[%s1] sm:$0xff]
  %v16 = vlaneseq
  %v17 = vshrl.u32 %v16, 7
  %v18 = vadd.s32 %v17, 8
  %v19 = vadd.s32 %v17, 16
  %v20 = vadd.s32 %v17, 24
  %v21 = vlaneseq
  %v22 = vand.u32 %v21, 127
  %vm23 = vcmp.eq.s32.totalorder %v17, %v22
  %vm24 = vcmp.eq.s32.totalorder %v18, %v22
  %vm25 = vcmp.eq.s32.totalorder %v19, %v22
  %vm26 = vcmp.eq.s32.totalorder %v20, %v22
  %v27 = vsel %vm23, 1, 0
  %v28 = vsel %vm24, 1, 0
  %v29 = vsel %vm25, 1, 0
  %v30 = vsel %vm26, 1, 0
  %v31 = vcvt.s32.f32 %v27
  %v32 = vcvt.s32.f32 %v28
  %v33 = vcvt.s32.f32 %v29
  %v34 = vcvt.s32.f32 %v30
  %v35 = vlaneseq
  %v36 = vshrl.u32 %v35, 7
  %v37 = vsub.s32 0, %v36
  %v38 = vrot.slane %v15, %v37
  %v39 = vmul.f32 %v38, %v31
  %v40 = vmul.f32 %v38, %v32
  %v41 = vmul.f32 %v38, %v33
  %v42 = vmul.f32 %v38, %v34
  %vm43 = vcmask 261120
  %v44 = vsel %vm43, %v39, 0.0
  %45 = vadd.xlane.f32.xlu0 %v44
  %v46 = vpop.xlane.xlu0 %45
  %v47 = vsel %vm43, %v40, 0.0
  %48 = vadd.xlane.f32.xlu0 %v47
  %v49 = vpop.xlane.xlu0 %48
  %v50 = vsel %vm43, %v41, 0.0
  %51 = vadd.xlane.f32.xlu0 %v50
  %v52 = vpop.xlane.xlu0 %51
  %v53 = vsel %vm43, %v42, 0.0
  %54 = vadd.xlane.f32.xlu0 %v53
  %v55 = vpop.xlane.xlu0 %54
  %v56 = vlaneseq
  %v57 = vshrl.u32 %v56, 7
  %v58 = vsub.s32 1, %v57
  %v59 = vrot.slane %v15, %v58
  %v60 = vmul.f32 %v59, %v31
  %v61 = vmul.f32 %v59, %v32
  %v62 = vmul.f32 %v59, %v33
  %v63 = vmul.f32 %v59, %v34
  %v64 = vsel %vm43, %v60, 0.0
  %65 = vadd.xlane.f32.xlu0 %v64
  %v66 = vpop.xlane.xlu0 %65
  %v67 = vsel %vm43, %v61, 0.0
  %68 = vadd.xlane.f32.xlu0 %v67
  %v69 = vpop.xlane.xlu0 %68
  %v70 = vsel %vm43, %v62, 0.0
  %71 = vadd.xlane.f32.xlu0 %v70
  %v72 = vpop.xlane.xlu0 %71
  %v73 = vsel %vm43, %v63, 0.0
  %74 = vadd.xlane.f32.xlu0 %v73
  %v75 = vpop.xlane.xlu0 %74
  %v76 = vmul.f32 %v11, %v66
  %v77 = vmul.f32 %v12, %v69
  %v78 = vmul.f32 %v13, %v72
  %v79 = vmul.f32 %v14, %v75
  %v80 = vadd.f32 %v76, %v77
  %v81 = vadd.f32 %v80, %v78
  %v82 = vadd.f32 %v81, %v79
  %v83 = vrot.slane %v82, 4
  %v84 = vadd.f32 %v82, %v83
  %v85 = vrot.slane %v84, 2
  %v86 = vadd.f32 %v84, %v85
  %v87 = vrot.slane %v86, 1
  %v88 = vadd.f32 %v86, %v87
  %v89 = vmul.f32 %v11, %v46
  %v90 = vmul.f32 %v12, %v49
  %v91 = vmul.f32 %v13, %v52
  %v92 = vmul.f32 %v14, %v55
  %v93 = vadd.f32 %v89, %v90
  %v94 = vadd.f32 %v93, %v91
  %v95 = vadd.f32 %v94, %v92
  %v96 = vrot.slane %v95, 4
  %v97 = vadd.f32 %v95, %v96
  %v98 = vrot.slane %v97, 2
  %v99 = vadd.f32 %v97, %v98
  %v100 = vrot.slane %v99, 1
  %v101 = vadd.f32 %v99, %v100
  %v102 = vmul.f32 %v101, %v31
  %v103 = vmul.f32 %v101, %v32
  %v104 = vmul.f32 %v101, %v33
  %v105 = vmul.f32 %v101, %v34
  %106 = vadd.xlane.f32.xlu0 %v102
  %v107 = vpop.xlane.xlu0 %106
  %108 = vadd.xlane.f32.xlu0 %v103
  %v109 = vpop.xlane.xlu0 %108
  %110 = vadd.xlane.f32.xlu0 %v104
  %v111 = vpop.xlane.xlu0 %110
  %112 = vadd.xlane.f32.xlu0 %v105
  %v113 = vpop.xlane.xlu0 %112
  %v114 = vmul.f32 %v15, %v38
  %v115 = vsel %vm43, %v114, 0.0
  %116 = vadd.xlane.f32.xlu0 %v115
  %v117 = vpop.xlane.xlu0 %116
  %vm118 = vcmp.lt.s32.totalorder %v22, 32
  %v119 = vadd.f32 %v88, %v117
  %121 = vset.pattern.permute.xlu0 0
  %122 = vperm.xlu0 %121, %v15
  %v123 = vpop.permute.xlu0 %122
  %v124 = vrot.slane %v123, 7
  %v126 = vadd.f32 %v119, %v124
  %v127 = vmul.f32 %v126, 0.5
  %v128 = vtanh.pop %v127
  %v129 = vmul.f32 %v128, 0.5
  %v130 = vadd.f32 %v129, 0.5
  %v131 = vlaneseq
  %v132 = vshrl.u32 %v131, 7
  %v133 = vsub.s32 6, %v132
  %v134 = vrot.slane %v117, %v133
  %v135 = vadd.f32 %v107, %v134
  %v136 = vadd.f32 %v109, %v134
  %v137 = vadd.f32 %v111, %v134
  %v138 = vadd.f32 %v113, %v134
  %v139 = vadd.f32 %v135, %v88
  %v140 = vadd.f32 %v136, %v88
  %v141 = vadd.f32 %v137, %v88
  %v142 = vadd.f32 %v138, %v88
  %v143 = vrot.slane %v15, 2
  %s144 = vtos %v143
  %v145 = vstv %s144
  %v147 = vadd.f32 %v139, %v145
  %v148 = vadd.f32 %v140, %v145
  %v149 = vadd.f32 %v141, %v145
  %v150 = vadd.f32 %v142, %v145
  %v151 = vmul.f32 %v147, 0.5
  %v152 = vmul.f32 %v148, 0.5
  %v153 = vmul.f32 %v149, 0.5
  %v154 = vmul.f32 %v150, 0.5
  %v155 = vtanh.pop %v151
  %v156 = vtanh.pop %v152
  %v157 = vtanh.pop %v153
  %v158 = vtanh.pop %v154
  %v159 = vmul.f32 %v155, 0.5
  %v160 = vmul.f32 %v156, 0.5
  %v161 = vmul.f32 %v157, 0.5
  %v162 = vmul.f32 %v158, 0.5
  %v163 = vadd.f32 %v159, 0.5
  %v164 = vadd.f32 %v160, 0.5
  %v165 = vadd.f32 %v161, 0.5
  %v166 = vadd.f32 %v162, 0.5
  %v167 = vrot.slane %v123, 6
  %v169 = vadd.f32 %v119, %v167
  %v170 = vmul.f32 %v169, 0.5
  %v171 = vtanh.pop %v170
  %v172 = vmul.f32 %v171, 0.5
  %v173 = vadd.f32 %v172, 0.5
  %v174 = vsub.f32 1.0, %v173
  %v175 = vsel %vm118, %v174, 0.0
  %v176 = vlaneseq
  %v177 = vshrl.u32 %v176, 7
  %v178 = vsub.s32 4, %v177
  %v179 = vrot.slane %v175, %v178
  %v180 = vmul.f32 %v163, %v179
  %v181 = vmul.f32 %v164, %v179
  %v182 = vmul.f32 %v165, %v179
  %v183 = vmul.f32 %v166, %v179
  %184 = vmax.xlane.f32.xlu0 %v180
  %v185 = vpop.xlane.xlu0 %184
  %186 = vmax.xlane.f32.xlu0 %v181
  %v187 = vpop.xlane.xlu0 %186
  %188 = vmax.xlane.f32.xlu0 %v182
  %v189 = vpop.xlane.xlu0 %188
  %190 = vmax.xlane.f32.xlu0 %v183
  %v191 = vpop.xlane.xlu0 %190
  %v192 = vmul.f32 %v185, %v31
  %v193 = vmul.f32 %v187, %v32
  %v194 = vmul.f32 %v189, %v33
  %v195 = vmul.f32 %v191, %v34
  %v196 = vadd.f32 %v192, %v193
  %v197 = vadd.f32 %v196, %v194
  %v198 = vadd.f32 %v197, %v195
  %v199 = vrot.slane %v198, 4
  %v200 = vadd.f32 %v198, %v199
  %v201 = vrot.slane %v200, 2
  %v202 = vadd.f32 %v200, %v201
  %v203 = vrot.slane %v202, 1
  %v204 = vadd.f32 %v202, %v203
  %v205 = vmul.f32 %v130, %v204
  %v206 = vrot.slane %v123, 5
  %v208 = vadd.f32 %v119, %v206
  %v209 = vmul.f32 %v208, 0.5
  %v210 = vtanh.pop %v209
  %v211 = vmul.f32 %v210, 0.5
  %v212 = vadd.f32 %v211, 0.5
  %v214 = vrot.slane %v212, 1
  %v216 = vadd.f32 %v173, %v214
  %v217 = vmul.f32 %v173, %v214
  %v218 = vsub.f32 %v216, %v217
  %v219 = vsel %vm118, %v218, 1.0
  %v220 = vsub.f32 1.0, %v163
  %v221 = vsub.f32 1.0, %v164
  %v222 = vsub.f32 1.0, %v165
  %v223 = vsub.f32 1.0, %v166
  %v224 = vlaneseq
  %v225 = vshrl.u32 %v224, 7
  %v226 = vsub.s32 4, %v225
  %v227 = vrot.slane %v219, %v226
  %v228 = vadd.f32 %v220, %v227
  %v229 = vadd.f32 %v221, %v227
  %v230 = vadd.f32 %v222, %v227
  %v231 = vadd.f32 %v223, %v227
  %v232 = vmul.f32 %v220, %v227
  %v233 = vmul.f32 %v221, %v227
  %v234 = vmul.f32 %v222, %v227
  %v235 = vmul.f32 %v223, %v227
  %v236 = vsub.f32 %v228, %v232
  %v237 = vsub.f32 %v229, %v233
  %v238 = vsub.f32 %v230, %v234
  %v239 = vsub.f32 %v231, %v235
  %240 = vmin.xlane.f32.xlu0 %v236
  %v241 = vpop.xlane.xlu0 %240
  %242 = vmin.xlane.f32.xlu0 %v237
  %v243 = vpop.xlane.xlu0 %242
  %244 = vmin.xlane.f32.xlu0 %v238
  %v245 = vpop.xlane.xlu0 %244
  %246 = vmin.xlane.f32.xlu0 %v239
  %v247 = vpop.xlane.xlu0 %246
  %v248 = vmul.f32 %v241, %v31
  %v249 = vmul.f32 %v243, %v32
  %v250 = vmul.f32 %v245, %v33
  %v251 = vmul.f32 %v247, %v34
  %v252 = vadd.f32 %v248, %v249
  %v253 = vadd.f32 %v252, %v250
  %v254 = vadd.f32 %v253, %v251
  %v255 = vrot.slane %v254, 4
  %v256 = vadd.f32 %v254, %v255
  %v257 = vrot.slane %v256, 2
  %v258 = vadd.f32 %v256, %v257
  %v259 = vrot.slane %v258, 1
  %v260 = vadd.f32 %v258, %v259
  %v261 = vmul.f32 %v205, %v260
  %262 = vst [vmem:[%s2 - $0x3] sm:$0x8] %v261
  // Predicated region
  $region10: #{fwd.1} parent=0 // pred_check
    _
  $region11: #{fwd.1} parent=0 // pred_check_branch
    %264 = sbr.rel (0) target = $region13
  $region12: #{fwd.1} parent=0 // pred_region
    _
  $region13: #{fwd.1} parent=0 // pred_fallthru
    _
  // Predicated region
  $region14: #{fwd.1} parent=0 // pred_check
    _
  $region15: #{fwd.1} parent=0 // pred_check_branch
    %266 = sbr.rel (0) target = $region17
  $region16: #{fwd.1} parent=0 // pred_region
    _
  $region17: #{fwd.1} parent=0 // pred_fallthru
    _

</llo_original>
